<compile_context>
chip_gen: v7x
topology: tpu7x:2x2x1
jax: 0.10.0
libtpu: 0.0.40
codegen_flags: <defaults>
</compile_context>

<pallas_src>
import functools

import jax
import jax.numpy as jnp
from jax import lax
from jax.experimental import pallas as pl
from jax.experimental.pallas import tpu as pltpu


_X_BLOCK_TARGET_BYTES = 8 * 1024 * 1024       # ~8 MiB X block per grid step
_VMEM_LIMIT_BYTES = 40 * 1024 * 1024          # 2 x 8 MiB double-buffer + slack


def _round_up(a, m):
    return ((a + m - 1) // m) * m


def _linreg_kernel(x_ref, w_ref, b_ref, o_ref):
    # x_ref: (TILE_N, D) VMEM (streamed / double-buffered)
    # w_ref: (1, D)      VMEM (resident across the grid)
    # b_ref: (1,)        SMEM scalar
    # o_ref: (1, 1, TILE_N) VMEM (lane-dense output row)
    #
    # Contract over D with the rhs "transposed":
    #   w_row(1, D) . X_tile(TILE_N, D)^T -> (1, TILE_N)
    # so per-row dot products land directly along lanes (unmasked vst).
    acc = lax.dot_general(
        w_ref[...], x_ref[...],
        dimension_numbers=(((1,), (1,)), ((), ())),
        preferred_element_type=jnp.float32,
    )  # (1, TILE_N), f32 accumulation
    o_ref[...] = (acc + b_ref[0]).reshape(o_ref.shape).astype(o_ref.dtype)


def _choose_tile(N, D):
    """Pick the row-tile size from a VMEM byte budget."""
    if N <= 128:
        # Single tiny block; output block equals the full array dims.
        return _round_up(max(N, 1), 8)
    bytes_per_row = 4 * D
    # ~8 MiB of X per block, rounded down to a multiple of 128 rows
    # (lane-dense output + sublane-aligned X block).
    tile = max(128, (_X_BLOCK_TARGET_BYTES // bytes_per_row) // 128 * 128)
    # Keep grid >= 2 so v7x megacore can shard row tiles across both cores.
    tile = min(tile, _round_up(pl.cdiv(N, 2), 128))
    # TODO(synk): for very wide feature dims (4*D*128 >> 8 MiB) add a D grid
    # axis marked "arbitrary" with a (1, tile) f32 accumulator instead of
    # shrinking the row tile; not needed for linear-regression-sized D.
    return max(tile, 128)


@jax.jit
def linreg_forward(x, w, b):
    """y = x @ w + b.   x: (N, D) f32, w: (D, 1) f32, b: (1,) f32 -> (N, 1) f32."""
    N, D = x.shape

    tile = _choose_tile(N, D)
    grid = pl.cdiv(N, tile)

    w_row = w.reshape(1, D)  # metadata-only reshape of the contiguous (D, 1) weights

    out = pl.pallas_call(
        _linreg_kernel,
        out_shape=jax.ShapeDtypeStruct((grid, 1, tile), x.dtype),
        grid=(grid,),
        in_specs=[
            # X: one (tile, D) block per grid step -> auto double-buffered DMA.
            # (Last partial block is padded by Pallas; the garbage lanes it
            #  produces are sliced off by the [:N] below.)
            pl.BlockSpec((tile, D), lambda i: (i, 0)),
            # w: same block every step -> kept resident in VMEM.
            pl.BlockSpec((1, D), lambda i: (0, 0)),
            # b: scalar in SMEM, no VMEM DMA / broadcast input.
            pl.BlockSpec(memory_space=pltpu.MemorySpace.SMEM),
        ],
        # (1, 1, tile) block == full last-two array dims -> (8,128)-rule safe,
        # lane-dense unmasked stores when tile % 128 == 0.
        out_specs=pl.BlockSpec((1, 1, tile), lambda i: (i, 0, 0)),
        compiler_params=pltpu.CompilerParams(
            dimension_semantics=("parallel",),          # row tiles are independent
            vmem_limit_bytes=_VMEM_LIMIT_BYTES,
        ),
        cost_estimate=pl.CostEstimate(
            flops=2 * N * D,
            transcendentals=0,
            bytes_accessed=4 * (N * D + N + D),
        ),
    )(x, w_row, b)

    # Flatten the lane-dense rows back to the module's (N, 1) output shape.
    return out.reshape(-1)[:N].reshape(N, 1)


if __name__ == "__main__":
    # Deterministic parameter init matching LinearRegressionScratch.__init__:
    #   w ~ Normal(0, sigma) with shape (num_inputs, 1); b = zeros(1)
    num_inputs = 32
    batch = 8
    sigma = 0.01

    key = jax.random.PRNGKey(0)
    kx, kw = jax.random.split(key)

    x = jax.random.normal(kx, (batch, num_inputs), dtype=jnp.float32)
    w = sigma * jax.random.normal(kw, (num_inputs, 1), dtype=jnp.float32)
    b = jnp.zeros((1,), dtype=jnp.float32)

    y = linreg_forward(x, w, b)
    jax.block_until_ready(y)

    y_ref = jnp.matmul(x, w) + b
    assert y.shape == (batch, 1)
    assert jnp.allclose(y, y_ref, atol=1e-3, rtol=1e-3)

    # Multi-tile, pipelined path (grid >= 2, exact tiling).
    kx2, kw2 = jax.random.split(jax.random.PRNGKey(1))
    x2 = jax.random.normal(kx2, (2048, 128), dtype=jnp.float32)
    w2 = sigma * jax.random.normal(kw2, (128, 1), dtype=jnp.float32)
    b2 = jnp.full((1,), 0.25, dtype=jnp.float32)

    y2 = linreg_forward(x2, w2, b2)
    jax.block_until_ready(y2)
    y2_ref = jnp.matmul(x2, w2) + b2
    assert y2.shape == (2048, 1)
    assert jnp.allclose(y2, y2_ref, atol=1e-3, rtol=1e-3)

    # Ragged case: partial last tile (N % tile != 0, grid > 1).
    kx3, kw3 = jax.random.split(jax.random.PRNGKey(2))
    x3 = jax.random.normal(kx3, (2500, 64), dtype=jnp.float32)
    w3 = sigma * jax.random.normal(kw3, (64, 1), dtype=jnp.float32)
    b3 = jnp.full((1,), -0.5, dtype=jnp.float32)

    y3 = linreg_forward(x3, w3, b3)
    jax.block_until_ready(y3)
    y3_ref = jnp.matmul(x3, w3) + b3
    assert y3.shape == (2500, 1)
    assert jnp.allclose(y3, y3_ref, atol=1e-3, rtol=1e-3)

    print("KERNEL_OK")
</pallas_src>

<mosaic_0001>
module attributes {stable_mosaic.version = 11 : i64} {
  func.func @_linreg_kernel(%arg0: i32, %arg1: memref<8x32xf32, #tpu.memory_space<vmem>>, %arg2: memref<1x32xf32, #tpu.memory_space<vmem>>, %arg3: memref<1xf32, #tpu.memory_space<smem>>, %arg4: memref<1x1x8xf32, #tpu.memory_space<vmem>>) attributes {dimension_semantics = [#tpu.dimension_semantics<parallel>], iteration_bounds = array<i64: 1>, scalar_prefetch = 0 : i64, scratch_operands = 0 : i64, tpu.core_type = #tpu.core_type<tc>, window_params = [{transform_indices = @transform_0, window_bounds = array<i64: 8, 32>}, {pipeline_mode = #tpu.pipeline_mode<synchronous>, transform_indices = @transform_1, window_bounds = array<i64: 1, 32>}, {transform_indices = @transform_2, window_bounds = array<i64: 1>}, {transform_indices = @transform_3, window_bounds = array<i64: 1, 1, 8>}]} {
    %c0 = arith.constant 0 : index
    %c0_0 = arith.constant 0 : index
    %0 = vector.load %arg2[%c0, %c0_0] : memref<1x32xf32, #tpu.memory_space<vmem>>, vector<1x32xf32>
    %c0_1 = arith.constant 0 : index
    %c0_2 = arith.constant 0 : index
    %1 = vector.load %arg1[%c0_1, %c0_2] : memref<8x32xf32, #tpu.memory_space<vmem>>, vector<8x32xf32>
    %cst = arith.constant dense<0.000000e+00> : vector<1x8xf32>
    %2 = tpu.matmul %0, %1, %cst {dimension_numbers = #tpu.dot_dimension_numbers<[1], [1], [0], [0], [0, 0, 1, 0], [], []>} : vector<1x32xf32>, vector<8x32xf32>, vector<1x8xf32> -> vector<1x8xf32>
    %c0_3 = arith.constant 0 : index
    %3 = memref.load %arg3[%c0_3] : memref<1xf32, #tpu.memory_space<smem>>
    %4 = vector.broadcast %3 : f32 to vector<1x8xf32>
    %5 = arith.addf %2, %4 : vector<1x8xf32>
    %6 = vector.shape_cast %5 : vector<1x8xf32> to vector<1x1x8xf32>
    %c0_4 = arith.constant 0 : index
    %c0_5 = arith.constant 0 : index
    %c0_6 = arith.constant 0 : index
    %7 = vector.load %arg4[%c0_4, %c0_5, %c0_6] : memref<1x1x8xf32, #tpu.memory_space<vmem>>, vector<1x1x8xf32>
    tpu.vector_store %arg4[%c0_4, %c0_5, %c0_6], %6 {strides = array<i32>} : memref<1x1x8xf32, #tpu.memory_space<vmem>>, vector<1x1x8xf32>,
    return
  }
  func.func @transform_0(%arg0: i32) -> (i32, i32) {
    %c0_i32 = arith.constant 0 : i32
    %c0_i32_0 = arith.constant 0 : i32
    return %arg0, %c0_i32 : i32, i32
  }
  func.func @transform_1(%arg0: i32) -> (i32, i32) {
    %c0_i32 = arith.constant 0 : i32
    %c0_i32_0 = arith.constant 0 : i32
    %c0_i32_1 = arith.constant 0 : i32
    return %c0_i32, %c0_i32_0 : i32, i32
  }
  func.func @transform_2(%arg0: i32) -> i32 {
    %c0_i32 = arith.constant 0 : i32
    %c0_i32_0 = arith.constant 0 : i32
    return %c0_i32 : i32
  }
  func.func @transform_3(%arg0: i32) -> (i32, i32, i32) {
    %c0_i32 = arith.constant 0 : i32
    %c0_i32_0 = arith.constant 0 : i32
    %c0_i32_1 = arith.constant 0 : i32
    return %arg0, %c0_i32, %c0_i32_0 : i32, i32, i32
  }
}

</mosaic_0001>

<llo_original>
// kernel: linreg_forward.1
$region0: #{linreg_forward.1}
  #allocation0 [shape = 'u32[]', space=smem, size = 0x4, offset = 0x4, fixed_abs, tag = 'smem constant byte address 0x4 - core index']
  #allocation1 [shape = 'u32[144,128]{1,0:T(1,128)}', space=vmem, size = 0x12000, scoped, tag = 'internal scratch']
  #allocation2 [shape = 'f32[1]{0:T(128)S(6)}', space=smem, size = 0x200, scoped, tag = 'scoped memory for linreg_forward.1']
  %s0 = inlined_call_operand.hbm [shape: f32[8,32], index: 0, kind: input, shape index: {}]
  %s1 = inlined_call_operand.vmem [shape: f32[1,32], index: 1, kind: input, shape index: {}]
  %s2 = inlined_call_operand.<no memory space> [shape: f32[1], index: 2, kind: input, shape index: {}]
  %s3 = inlined_call_operand.hbm [shape: f32[1,1,8], index: 3, kind: output, shape index: {}]
  %s4 = sld [smem:[#allocation0]]
  $region26: #{linreg_forward.1} parent=0
    _
  %s6 = ssub.s32 1, %s4
  %s7 = scalar_select 0, %s6, %s4
  %8 = sst [smem:[#allocation2]] %s2
  $region1: #{linreg_forward.1} parent=0
    #allocation3 [shape = 'u8[4096]{0}', space=vmem, size = 0x1000, scoped, tag = 'input window, operand 0, single buffered']
    #allocation4 [shape = 's32[1]{0}', space=sflag, size = 0x4, scoped, tag = 'scoped memory for linreg_forward.1']
    #allocation5 [shape = 's32[1]{0}', space=sflag, size = 0x4, scoped, tag = 'scoped memory for linreg_forward.1']
    #allocation6 [shape = 'u8[512]{0}', space=vmem, size = 0x400, scoped, tag = 'output window, operand 0, single buffered']
    %9 = vsyncpa [#allocation4], 0
    %10 = vsyncpa [#allocation5], 0
    // Predicated region
    $region2: #{linreg_forward.1} parent=1 // pred_check
      _
    $region3: #{linreg_forward.1} parent=1 // pred_check_branch
      %12 = sbr.rel (0) target = $region5
    $region4: #{linreg_forward.1} parent=1 // pred_region
      %s14 = ssub.s32 128, 128
      %15 = vsyncadd [#allocation4], %s14
      %s17 = sshll.u32 [#allocation3], 4
      %s18 = int_to_ptr.vmem [resolvable:$true] %s17
      %20 = dma.hbm_to_vmem [thread:$0]  %s0, 128, %s18, [#allocation4]
    $region5: #{linreg_forward.1} parent=1 // pred_fallthru
      _
    // Predicated region
    $region6: #{linreg_forward.1} parent=1 // pred_check
      _
    $region7: #{linreg_forward.1} parent=1 // pred_check_branch
      %22 = sbr.rel (0) target = $region9
    $region8: #{linreg_forward.1} parent=1 // pred_region
      _
    $region9: #{linreg_forward.1} parent=1 // pred_fallthru
      _
    // Predicated region
    $region10: #{linreg_forward.1} parent=1 // pred_check
      _
    $region11: #{linreg_forward.1} parent=1 // pred_check_branch
      %24 = sbr.rel (0) target = $region13
    $region12: #{linreg_forward.1} parent=1 // pred_region
      _
    $region13: #{linreg_forward.1} parent=1 // pred_fallthru
      _
    // Predicated region
    $region14: #{linreg_forward.1} parent=1 // pred_check
      _
    $region15: #{linreg_forward.1} parent=1 // pred_check_branch
      %26 = sbr.rel (0) target = $region17
    $region16: #{linreg_forward.1} parent=1 // pred_region
      %27 = dma.done [#allocation4], 128
    $region17: #{linreg_forward.1} parent=1 // pred_fallthru
      _
    %v28 = vld [vmem:[%s1] sm:$0x1]
    %v29 = vld [vmem:[#allocation3] sm:$0xff]
    %s30 = sld [smem:[#allocation2]]
    %v31 = vstv %s30
    %vm32 = vcmask 261120
    %v34 = vsel %vm32, %v28, 0
    %v37 = vsel %vm32, %v29, 0
    %39 = vmatprep.subr.mxu0 0.0
    %40 = vmatpush1.xpose.msra.mxu0 %v37
    %41 = vmatprep.subr.mxu0 0.0
    %42 = vmatpush1.xpose.msra.mxu0 0.0
    %43 = vmatprep.subr.mxu0 0.0
    %44 = vmatpush1.xpose.msra.mxu0 0.0
    %45 = vmatprep.subr.mxu0 0.0
    %46 = vmatpush1.xpose.msra.mxu0 0.0
    %47 = vmatprep.subr.mxu0 0.0
    %48 = vmatpush1.xpose.msra.mxu0 0.0
    %49 = vmatprep.subr.mxu0 0.0
    %50 = vmatpush1.xpose.msra.mxu0 0.0
    %51 = vmatprep.subr.mxu0 0.0
    %52 = vmatpush1.xpose.msra.mxu0 0.0
    %53 = vmatprep.subr.mxu0 0.0
    %54 = vmatpush1.xpose.msra.mxu0 0.0
    %55 = vmatprep.subr.mxu0 0.0
    %56 = vmatpush1.xpose.msra.mxu0 0.0
    %57 = vmatprep.subr.mxu0 0.0
    %58 = vmatpush1.xpose.msra.mxu0 0.0
    %59 = vmatprep.subr.mxu0 0.0
    %60 = vmatpush1.xpose.msra.mxu0 0.0
    %61 = vmatprep.subr.mxu0 0.0
    %62 = vmatpush1.xpose.msra.mxu0 0.0
    %63 = vmatprep.subr.mxu0 0.0
    %64 = vmatpush1.xpose.msra.mxu0 0.0
    %65 = vmatprep.subr.mxu0 0.0
    %66 = vmatpush1.xpose.msra.mxu0 0.0
    %67 = vmatprep.subr.mxu0 0.0
    %68 = vmatpush1.xpose.msra.mxu0 0.0
    %69 = vmatprep.subr.mxu0 0.0
    %70 = vmatpush1.xpose.msra.mxu0 0.0
    %71 = vmatprep.subr.mxu0 0.0
    %72 = vmatpush1.xpose.msra.mxu0 0.0
    %73 = vmatprep.subr.mxu0 0.0
    %74 = vmatpush1.xpose.msra.mxu0 0.0
    %75 = vmatprep.subr.mxu0 0.0
    %76 = vmatpush1.xpose.msra.mxu0 0.0
    %77 = vmatprep.subr.mxu0 0.0
    %78 = vmatpush1.xpose.msra.mxu0 0.0
    %79 = vmatprep.subr.mxu0 0.0
    %80 = vmatpush1.xpose.msra.mxu0 0.0
    %81 = vmatprep.subr.mxu0 0.0
    %82 = vmatpush1.xpose.msra.mxu0 0.0
    %83 = vmatprep.subr.mxu0 0.0
    %84 = vmatpush1.xpose.msra.mxu0 0.0
    %85 = vmatprep.subr.mxu0 0.0
    %86 = vmatpush1.xpose.msra.mxu0 0.0
    %87 = vmatprep.subr.mxu0 0.0
    %88 = vmatpush1.xpose.msra.mxu0 0.0
    %89 = vmatprep.subr.mxu0 0.0
    %90 = vmatpush1.xpose.msra.mxu0 0.0
    %91 = vmatprep.subr.mxu0 0.0
    %92 = vmatpush1.xpose.msra.mxu0 0.0
    %93 = vmatprep.subr.mxu0 0.0
    %94 = vmatpush1.xpose.msra.mxu0 0.0
    %95 = vmatprep.subr.mxu0 0.0
    %96 = vmatpush1.xpose.msra.mxu0 0.0
    %97 = vmatprep.subr.mxu0 0.0
    %98 = vmatpush1.xpose.msra.mxu0 0.0
    %99 = vmatprep.subr.mxu0 0.0
    %100 = vmatpush1.xpose.msra.mxu0 0.0
    %101 = vmatprep.subr.mxu0 0.0
    %102 = vmatpush1.xpose.msra.mxu0 0.0
    %103 = vmatprep.mubr.f32.mxu0 0.0
    %104 = vmatmul.mubr.f32.gmra.mrb[0].mxu0 %v34
    %v105 = vpop.f32.mrb[0].mxu0
    %v106 = vadd.f32 %v31, %v105
    %v107 = vpop.f32.mrb[0].mxu0
    %108 = vdwg.mxu0
    %vm109 = vcmask 57344
    %110 = vst.msk [vmem:[#allocation6] sm:$0x1] %vm109, %v106
    // Predicated region
    $region18: #{linreg_forward.1} parent=1 // pred_check
      _
    $region19: #{linreg_forward.1} parent=1 // pred_check_branch
      %112 = sbr.rel (0) target = $region21
    $region20: #{linreg_forward.1} parent=1 // pred_region
      %s114 = ssub.s32 16, 16
      %115 = vsyncadd [#allocation5], %s114
      %s117 = sshll.u32 [#allocation6], 4
      %s118 = int_to_ptr.vmem [resolvable:$true] %s117
      %120 = dma.vmem_to_hbm [thread:$0]  %s118, 16, %s3, [#allocation5]
    $region21: #{linreg_forward.1} parent=1 // pred_fallthru
      _
    // Predicated region
    $region22: #{linreg_forward.1} parent=1 // pred_check
      _
    $region23: #{linreg_forward.1} parent=1 // pred_check_branch
      %122 = sbr.rel (0) target = $region25
    $region24: #{linreg_forward.1} parent=1 // pred_region
      %123 = dma.done [#allocation5], 16
    $region25: #{linreg_forward.1} parent=1 // pred_fallthru
      _
    %124 = vsyncpa [#allocation4], 1
    %125 = vsyncpa [#allocation5], 1

</llo_original>
